<compile_context>
chip_gen: v6e
topology: v6e:2x2x1
jax: 0.10.0
libtpu: 0.0.40
codegen_flags: <defaults>
</compile_context>

<pallas_src>
import jax
import jax.numpy as jnp
from jax.experimental import pallas as pl
from jax.experimental.pallas import tpu as pltpu


def _round_up(n, m):
    return ((n + m - 1) // m) * m


def _mlp_kernel(x_ref, w1_ref, b1_ref, w2_ref, b2_ref, o_ref):
    # x_ref : (TB, D)   w1_ref : (D, H)   b1_ref : (1, H)
    # w2_ref: (8, H)    b2_ref : (1,) scalar in SMEM
    # o_ref : (8, TB)   (all 8 rows identical; row 0 is the result)
    x = x_ref[...]
    w1 = w1_ref[...]

    # Layer 1: Linear(D -> H) on the MXU with f32 accumulation; bias + ReLU on
    # the VPU in f32.
    h = jnp.dot(x, w1, preferred_element_type=jnp.float32)
    h = jnp.maximum(h + b1_ref[...].astype(jnp.float32), 0.0)

    # Layer 2: Linear(H -> 1).  Contract the replicated w2 rows against h
    # ("q @ k.T" pattern): (8, H) . (TB, H)^T -> (8, TB).  This keeps the
    # output lane-dense along the batch dimension instead of producing a
    # lane-width-1 (TB, 1) column that would need masked stores.
    w2 = w2_ref[...].astype(jnp.float32)
    y = jax.lax.dot_general(
        w2, h,
        dimension_numbers=(((1,), (1,)), ((), ())),
        preferred_element_type=jnp.float32,
    )
    y = y + b2_ref[0]

    o_ref[...] = y.astype(o_ref.dtype)


def triplet_linear_classifier_2layers(x, w1, b1, w2, b2, *, block_batch=512):
    """x: (B, D). Returns (B,) — matches PyTorch's squeeze(-1)."""
    B, D = x.shape
    H = D // 2
    assert w1.shape == (D, H) and b1.shape == (H,)
    assert w2.shape == (H, 1) and b2.shape == (1,)

    # NOTE: for tiny problems (a few thousand flops) plain jnp/XLA is faster
    # than any custom call; this wrapper always takes the Pallas path so the
    # kernel is exercised.

    # Batch tile: multiple of 128 (lane-dense output), capped so small batches
    # are not over-padded.
    tb = max(128, (int(block_batch) // 128) * 128)
    tb = min(tb, _round_up(B, 128))
    b_pad = _round_up(B, tb)
    num_tiles = b_pad // tb

    x_p = x if b_pad == B else jnp.pad(x, ((0, b_pad - B), (0, 0)))

    b1_2d = b1.reshape(1, H)
    w2_8 = jnp.broadcast_to(w2.reshape(1, H), (8, H))   # replicated rows
    b2_s = b2.reshape(1).astype(jnp.float32)            # SMEM scalar

    out_dtype = x.dtype
    itemsize = jnp.dtype(x.dtype).itemsize

    # VMEM budget: double-buffered x tile + resident weights + output slab,
    # plus generous slack.  Capped at 64 MiB so the request is valid on v7x.
    vmem_est = (2 * tb * D * itemsize                 # x (double-buffered)
                + 2 * D * H * itemsize                # w1
                + 4 * 8 * _round_up(H, 128) * 4       # b1 + w2 tiles (padded)
                + 2 * 8 * tb * 4)                     # output slab
    vmem_limit = int(min(vmem_est + (16 << 20), 64 << 20))

    cost = pl.CostEstimate(
        flops=2 * b_pad * D * H + 2 * 8 * b_pad * H,
        transcendentals=0,
        bytes_accessed=int((b_pad * D + D * H + 8 * H + H) * itemsize
                           + 4 + 8 * b_pad * jnp.dtype(out_dtype).itemsize),
    )

    out = pl.pallas_call(
        _mlp_kernel,
        out_shape=jax.ShapeDtypeStruct((8, b_pad), out_dtype),
        grid_spec=pltpu.PrefetchScalarGridSpec(
            num_scalar_prefetch=0,
            grid=(num_tiles,),
            in_specs=[
                pl.BlockSpec((tb, D), lambda i: (i, 0)),    # x: streamed
                pl.BlockSpec((D, H), lambda i: (0, 0)),     # w1: resident
                pl.BlockSpec((1, H), lambda i: (0, 0)),     # b1: resident
                pl.BlockSpec((8, H), lambda i: (0, 0)),     # w2 (replicated)
                pl.BlockSpec(memory_space=pltpu.MemorySpace.SMEM),  # b2 scalar
            ],
            out_specs=pl.BlockSpec((8, tb), lambda i: (0, i)),
        ),
        compiler_params=pltpu.CompilerParams(
            dimension_semantics=("parallel",),
            vmem_limit_bytes=vmem_limit,
        ),
        cost_estimate=cost,
    )(x_p, w1, b1_2d, w2_8, b2_s)

    return out[0, :B]   # row 0 of the lane-dense slab, drop batch padding


def _reference(x, w1, b1, w2, b2):
    h = jnp.maximum(x @ w1 + b1, 0.0)
    return (h @ w2 + b2)[:, 0]


if __name__ == "__main__":
    key = jax.random.PRNGKey(0)
    B, D = 300, 128          # small; exercises 3 batch tiles + remainder padding
    H = D // 2

    k_x, k_w1, k_b1, k_w2, k_b2 = jax.random.split(key, 5)
    x = jax.random.normal(k_x, (B, D), dtype=jnp.float32)

    # Deterministic parameter init (uniform, Linear-style bounds).
    bound1 = 1.0 / (D ** 0.5)
    bound2 = 1.0 / (H ** 0.5)
    w1 = jax.random.uniform(k_w1, (D, H), jnp.float32, -bound1, bound1)
    b1 = jax.random.uniform(k_b1, (H,), jnp.float32, -bound1, bound1)
    w2 = jax.random.uniform(k_w2, (H, 1), jnp.float32, -bound2, bound2)
    b2 = jax.random.uniform(k_b2, (1,), jnp.float32, -bound2, bound2)

    y = triplet_linear_classifier_2layers(x, w1, b1, w2, b2, block_batch=128)
    y = jax.block_until_ready(y)

    y_ref = _reference(x, w1, b1, w2, b2)
    assert y.shape == (B,), y.shape
    assert jnp.allclose(y, y_ref, atol=1e-4, rtol=1e-4), float(
        jnp.max(jnp.abs(y - y_ref)))

    print("KERNEL_OK")
</pallas_src>

<mosaic_0001>
module attributes {stable_mosaic.version = 11 : i64} {
  func.func @_mlp_kernel(%arg0: i32, %arg1: memref<128x128xf32, #tpu.memory_space<vmem>>, %arg2: memref<128x64xf32, #tpu.memory_space<vmem>>, %arg3: memref<1x64xf32, #tpu.memory_space<vmem>>, %arg4: memref<8x64xf32, #tpu.memory_space<vmem>>, %arg5: memref<1xf32, #tpu.memory_space<smem>>, %arg6: memref<8x128xf32, #tpu.memory_space<vmem>>) attributes {dimension_semantics = [#tpu.dimension_semantics<parallel>], iteration_bounds = array<i64: 3>, scalar_prefetch = 0 : i64, scratch_operands = 0 : i64, tpu.core_type = #tpu.core_type<tc>, window_params = [{transform_indices = @transform_0, window_bounds = array<i64: 128, 128>}, {pipeline_mode = #tpu.pipeline_mode<synchronous>, transform_indices = @transform_1, window_bounds = array<i64: 128, 64>}, {pipeline_mode = #tpu.pipeline_mode<synchronous>, transform_indices = @transform_2, window_bounds = array<i64: 1, 64>}, {pipeline_mode = #tpu.pipeline_mode<synchronous>, transform_indices = @transform_3, window_bounds = array<i64: 8, 64>}, {transform_indices = @transform_4, window_bounds = array<i64: 1>}, {transform_indices = @transform_5, window_bounds = array<i64: 8, 128>}]} {
    %c0 = arith.constant 0 : index
    %c0_0 = arith.constant 0 : index
    %0 = vector.load %arg1[%c0, %c0_0] : memref<128x128xf32, #tpu.memory_space<vmem>>, vector<128x128xf32>
    %c0_1 = arith.constant 0 : index
    %c0_2 = arith.constant 0 : index
    %1 = vector.load %arg2[%c0_1, %c0_2] : memref<128x64xf32, #tpu.memory_space<vmem>>, vector<128x64xf32>
    %cst = arith.constant dense<0.000000e+00> : vector<128x64xf32>
    %2 = tpu.matmul %0, %1, %cst {dimension_numbers = #tpu.dot_dimension_numbers<[1], [0], [0], [1], [0, 0, 1, 1], [], []>} : vector<128x128xf32>, vector<128x64xf32>, vector<128x64xf32> -> vector<128x64xf32>
    %c0_3 = arith.constant 0 : index
    %c0_4 = arith.constant 0 : index
    %3 = vector.load %arg3[%c0_3, %c0_4] : memref<1x64xf32, #tpu.memory_space<vmem>>, vector<1x64xf32>
    %4 = vector.broadcast %3 : vector<1x64xf32> to vector<128x64xf32>
    %5 = arith.addf %2, %4 : vector<128x64xf32>
    %cst_5 = arith.constant 0.000000e+00 : f32
    %6 = vector.broadcast %cst_5 : f32 to vector<128x64xf32>
    %7 = arith.maximumf %5, %6 : vector<128x64xf32>
    %c0_6 = arith.constant 0 : index
    %c0_7 = arith.constant 0 : index
    %8 = vector.load %arg4[%c0_6, %c0_7] : memref<8x64xf32, #tpu.memory_space<vmem>>, vector<8x64xf32>
    %cst_8 = arith.constant dense<0.000000e+00> : vector<8x128xf32>
    %9 = tpu.matmul %8, %7, %cst_8 {dimension_numbers = #tpu.dot_dimension_numbers<[1], [1], [0], [0], [0, 0, 1, 0], [], []>} : vector<8x64xf32>, vector<128x64xf32>, vector<8x128xf32> -> vector<8x128xf32>
    %c0_9 = arith.constant 0 : index
    %10 = memref.load %arg5[%c0_9] : memref<1xf32, #tpu.memory_space<smem>>
    %11 = vector.broadcast %10 : f32 to vector<8x128xf32>
    %12 = arith.addf %9, %11 : vector<8x128xf32>
    %c0_10 = arith.constant 0 : index
    %c0_11 = arith.constant 0 : index
    %13 = vector.load %arg6[%c0_10, %c0_11] : memref<8x128xf32, #tpu.memory_space<vmem>>, vector<8x128xf32>
    tpu.vector_store %arg6[%c0_10, %c0_11], %12 {strides = array<i32>} : memref<8x128xf32, #tpu.memory_space<vmem>>, vector<8x128xf32>,
    return
  }
  func.func @transform_0(%arg0: i32) -> (i32, i32) {
    %c0_i32 = arith.constant 0 : i32
    %c0_i32_0 = arith.constant 0 : i32
    return %arg0, %c0_i32 : i32, i32
  }
  func.func @transform_1(%arg0: i32) -> (i32, i32) {
    %c0_i32 = arith.constant 0 : i32
    %c0_i32_0 = arith.constant 0 : i32
    %c0_i32_1 = arith.constant 0 : i32
    return %c0_i32, %c0_i32_0 : i32, i32
  }
  func.func @transform_2(%arg0: i32) -> (i32, i32) {
    %c0_i32 = arith.constant 0 : i32
    %c0_i32_0 = arith.constant 0 : i32
    %c0_i32_1 = arith.constant 0 : i32
    return %c0_i32, %c0_i32_0 : i32, i32
  }
  func.func @transform_3(%arg0: i32) -> (i32, i32) {
    %c0_i32 = arith.constant 0 : i32
    %c0_i32_0 = arith.constant 0 : i32
    %c0_i32_1 = arith.constant 0 : i32
    return %c0_i32, %c0_i32_0 : i32, i32
  }
  func.func @transform_4(%arg0: i32) -> i32 {
    %c0_i32 = arith.constant 0 : i32
    %c0_i32_0 = arith.constant 0 : i32
    return %c0_i32 : i32
  }
  func.func @transform_5(%arg0: i32) -> (i32, i32) {
    %c0_i32 = arith.constant 0 : i32
    %c0_i32_0 = arith.constant 0 : i32
    return %c0_i32, %arg0 : i32, i32
  }
}

</mosaic_0001>

<llo_original>
// kernel: tpu_custom_call.1
$region0: #{tpu_custom_call.1}
  #allocation0 [shape = 'u32[]', space=smem, size = 0x4, offset = 0x4, fixed_abs, tag = 'smem constant byte address 0x4 - core index']
  #allocation1 [shape = 'u32[144,128]{1,0:T(1,128)}', space=vmem, size = 0x12000, scoped, tag = 'internal scratch']
  #allocation2 [shape = 'f32[1]{0:T(128)S(6)}', space=smem, size = 0x200, scoped, tag = 'scoped memory for tpu_custom_call.1']
  %s0 = inlined_call_operand.hbm [shape: f32[384,128], index: 0, kind: input, shape index: {}]
  %s1 = inlined_call_operand.vmem [shape: f32[128,64], index: 1, kind: input, shape index: {}]
  %s2 = inlined_call_operand.vmem [shape: f32[1,64], index: 2, kind: input, shape index: {}]
  %s3 = inlined_call_operand.vmem [shape: f32[8,64], index: 3, kind: input, shape index: {}]
  %s4 = inlined_call_operand.<no memory space> [shape: f32[1], index: 4, kind: input, shape index: {}]
  %s5 = inlined_call_operand.hbm [shape: f32[8,384], index: 5, kind: output, shape index: {}]
  %s6 = sld [smem:[#allocation0]]
  $region57: #{tpu_custom_call.1} parent=0
    _
  %s8 = ssub.s32 1, %s6
  %s9 = scalar_select 0, %s8, %s6
  %10 = sst [smem:[#allocation2]] %s4
  $region1: #{tpu_custom_call.1} parent=0
    #allocation3 [shape = 'u8[131072]{0}', space=vmem, size = 0x20000, scoped, tag = 'input window, operand 0']
    #allocation4 [shape = 's32[2]{0}', space=sflag, size = 0x8, scoped, tag = 'scoped memory for tpu_custom_call.1']
    #allocation5 [shape = 's32[2]{0}', space=sflag, size = 0x8, scoped, tag = 'scoped memory for tpu_custom_call.1']
    #allocation6 [shape = 'u8[8192]{0}', space=vmem, size = 0x2000, scoped, tag = 'output window, operand 0']
    %11 = vsyncpa [#allocation4], 0
    %s12 = scalar_lea.sflag [#allocation4], 1
    %13 = vsyncpa %s12, 0
    %14 = vsyncpa [#allocation5], 0
    %s15 = scalar_lea.sflag [#allocation5], 1
    %16 = vsyncpa %s15, 0
    loop: start=0, step=1, limit=5
    $region2: #{tpu_custom_call.1} parent=1 // loop_pre_header
      _
    $region3: #{tpu_custom_call.1} parent=1 // loop_header
      %s18 = sphi 0, %s22
      %p19 = scmp.ge.s32.totalorder %s18, 5
      %s28 = sphi 0, %s30
      %s31 = sphi 0, %s28
      %s32 = sphi 0, %s31
      %s48 = sphi 0, %s32
      %s52 = sphi 0, %s52
      %s54 = sphi 0, %s52
      %s55 = sphi 0, %s54
      %s69 = sphi 0, %s55
      %s73 = sphi 0, %s73
      %s75 = sphi 0, %s73
      %s76 = sphi 0, %s75
      %s90 = sphi 0, %s76
      %s94 = sphi 0, %s94
      %s96 = sphi 0, %s94
      %s97 = sphi 0, %s96
      %s111 = sphi 0, %s97
      %s115 = sphi 0, %s115
      %s117 = sphi 0, %s115
      %s118 = sphi 0, %s117
      %s132 = sphi 0, %s118
      %s138 = sphi 0, %s140
      %s141 = sphi 0, %s138
      %s142 = sphi 0, %s141
      %s158 = sphi 0, %s142
    $region4: #{tpu_custom_call.1} parent=1 // loop_header_branch
      %21 = sbr.rel (%p19) target = $region8
    $region5: #{tpu_custom_call.1} parent=1 // loop_body
      %s23 = ssub.s32 %s18, 1
      %s24 = ssub.s32 %s18, 2
      %s25 = sadd.s32 %s18, 1
      %s26 = ssub.s32 %s18, %s25
      %p27 = scmp.eq.s32.totalorder %s26, 0
      %s29 = sadd.s32 %s28, 1
      %s30 = scalar_select %p27, %s28, %s29
      %p33 = pneg %p27
      %p34 = scmp.eq.s32.totalorder %s18, 2
      %p35 = por %p33, %p34
      %p36 = scmp.ne.s32.totalorder %s28, %s31
      %p37 = scmp.eq.s32.totalorder %s18, 0
      %p38 = por %p36, %p37
      %p39 = scmp.ne.s32.totalorder %s28, %s31
      %p40 = scmp.eq.s32.totalorder %s23, 2
      %p41 = por %p39, %p40
      %p42 = scmp.ne.s32.totalorder %s31, %s32
      %p43 = scmp.eq.s32.totalorder %s23, 0
      %p44 = por %p42, %p43
      %p45 = scmp.ne.s32.totalorder %s31, %s32
      %p46 = scmp.eq.s32.totalorder %s24, 2
      %p47 = por %p45, %p46
      %p49 = scmp.ne.s32.totalorder %s32, %s48
      %p50 = scmp.eq.s32.totalorder %s24, 0
      %p51 = por %p49, %p50
      %s53 = sadd.s32 %s52, 1
      %p56 = scmp.eq.s32.totalorder %s18, 2
      %p57 = scmp.ne.s32.totalorder %s52, %s54
      %p58 = scmp.eq.s32.totalorder %s18, 0
      %p59 = por %p57, %p58
      %p60 = scmp.ne.s32.totalorder %s52, %s54
      %p61 = scmp.eq.s32.totalorder %s23, 2
      %p62 = por %p60, %p61
      %p63 = scmp.ne.s32.totalorder %s54, %s55
      %p64 = scmp.eq.s32.totalorder %s23, 0
      %p65 = por %p63, %p64
      %p66 = scmp.ne.s32.totalorder %s54, %s55
      %p67 = scmp.eq.s32.totalorder %s24, 2
      %p68 = por %p66, %p67
      %p70 = scmp.ne.s32.totalorder %s55, %s69
      %p71 = scmp.eq.s32.totalorder %s24, 0
      %p72 = por %p70, %p71
      %s74 = sadd.s32 %s73, 1
      %p77 = scmp.eq.s32.totalorder %s18, 2
      %p78 = scmp.ne.s32.totalorder %s73, %s75
      %p79 = scmp.eq.s32.totalorder %s18, 0
      %p80 = por %p78, %p79
      %p81 = scmp.ne.s32.totalorder %s73, %s75
      %p82 = scmp.eq.s32.totalorder %s23, 2
      %p83 = por %p81, %p82
      %p84 = scmp.ne.s32.totalorder %s75, %s76
      %p85 = scmp.eq.s32.totalorder %s23, 0
      %p86 = por %p84, %p85
      %p87 = scmp.ne.s32.totalorder %s75, %s76
      %p88 = scmp.eq.s32.totalorder %s24, 2
      %p89 = por %p87, %p88
      %p91 = scmp.ne.s32.totalorder %s76, %s90
      %p92 = scmp.eq.s32.totalorder %s24, 0
      %p93 = por %p91, %p92
      %s95 = sadd.s32 %s94, 1
      %p98 = scmp.eq.s32.totalorder %s18, 2
      %p99 = scmp.ne.s32.totalorder %s94, %s96
      %p100 = scmp.eq.s32.totalorder %s18, 0
      %p101 = por %p99, %p100
      %p102 = scmp.ne.s32.totalorder %s94, %s96
      %p103 = scmp.eq.s32.totalorder %s23, 2
      %p104 = por %p102, %p103
      %p105 = scmp.ne.s32.totalorder %s96, %s97
      %p106 = scmp.eq.s32.totalorder %s23, 0
      %p107 = por %p105, %p106
      %p108 = scmp.ne.s32.totalorder %s96, %s97
      %p109 = scmp.eq.s32.totalorder %s24, 2
      %p110 = por %p108, %p109
      %p112 = scmp.ne.s32.totalorder %s97, %s111
      %p113 = scmp.eq.s32.totalorder %s24, 0
      %p114 = por %p112, %p113
      %s116 = sadd.s32 %s115, 1
      %p119 = scmp.eq.s32.totalorder %s18, 2
      %p120 = scmp.ne.s32.totalorder %s115, %s117
      %p121 = scmp.eq.s32.totalorder %s18, 0
      %p122 = por %p120, %p121
      %p123 = scmp.ne.s32.totalorder %s115, %s117
      %p124 = scmp.eq.s32.totalorder %s23, 2
      %p125 = por %p123, %p124
      %p126 = scmp.ne.s32.totalorder %s117, %s118
      %p127 = scmp.eq.s32.totalorder %s23, 0
      %p128 = por %p126, %p127
      %p129 = scmp.ne.s32.totalorder %s117, %s118
      %p130 = scmp.eq.s32.totalorder %s24, 2
      %p131 = por %p129, %p130
      %p133 = scmp.ne.s32.totalorder %s118, %s132
      %p134 = scmp.eq.s32.totalorder %s24, 0
      %p135 = por %p133, %p134
      %s136 = ssub.s32 %s18, %s25
      %p137 = scmp.eq.s32.totalorder %s136, 0
      %s139 = sadd.s32 %s138, 1
      %s140 = scalar_select %p137, %s138, %s139
      %p143 = pneg %p137
      %p144 = scmp.eq.s32.totalorder %s18, 2
      %p145 = por %p143, %p144
      %p146 = scmp.ne.s32.totalorder %s138, %s141
      %p147 = scmp.eq.s32.totalorder %s18, 0
      %p148 = por %p146, %p147
      %p149 = scmp.ne.s32.totalorder %s138, %s141
      %p150 = scmp.eq.s32.totalorder %s23, 2
      %p151 = por %p149, %p150
      %p152 = scmp.ne.s32.totalorder %s141, %s142
      %p153 = scmp.eq.s32.totalorder %s23, 0
      %p154 = por %p152, %p153
      %p155 = scmp.ne.s32.totalorder %s141, %s142
      %p156 = scmp.eq.s32.totalorder %s24, 2
      %p157 = por %p155, %p156
      %p159 = scmp.ne.s32.totalorder %s142, %s158
      %p160 = scmp.eq.s32.totalorder %s24, 0
      %p161 = por %p159, %p160
      %p162 = scmp.le.s32.totalorder 1, %s18
      %p163 = scmp.lt.s32.totalorder %s18, 4
      %p164 = pnand %p162, %p163
      %p165 = pneg %p164
      // Predicated region
      $region9: #{tpu_custom_call.1} parent=5 // pred_check
        _
      $region10: #{tpu_custom_call.1} parent=5 // pred_check_branch
        %167 = sbr.rel (%p164) target = $region12
      $region11: #{tpu_custom_call.1} parent=5 // pred_region
        %s168 = ssub.s32 %s18, 1
        // Predicated region
        $region13: #{tpu_custom_call.1} parent=11 // pred_check
          %p169 = pneg %p65
        $region14: #{tpu_custom_call.1} parent=11 // pred_check_branch
          %171 = sbr.rel (%p169) target = $region16
        $region15: #{tpu_custom_call.1} parent=11 // pred_region
          _
        $region16: #{tpu_custom_call.1} parent=11 // pred_fallthru
          _
        // Predicated region
        $region17: #{tpu_custom_call.1} parent=11 // pred_check
          %p172 = pneg %p86
        $region18: #{tpu_custom_call.1} parent=11 // pred_check_branch
          %174 = sbr.rel (%p172) target = $region20
        $region19: #{tpu_custom_call.1} parent=11 // pred_region
          _
        $region20: #{tpu_custom_call.1} parent=11 // pred_fallthru
          _
        // Predicated region
        $region21: #{tpu_custom_call.1} parent=11 // pred_check
          %p175 = pneg %p107
        $region22: #{tpu_custom_call.1} parent=11 // pred_check_branch
          %177 = sbr.rel (%p175) target = $region24
        $region23: #{tpu_custom_call.1} parent=11 // pred_region
          _
        $region24: #{tpu_custom_call.1} parent=11 // pred_fallthru
          _
        // Predicated region
        $region25: #{tpu_custom_call.1} parent=11 // pred_check
          %p178 = pneg %p128
        $region26: #{tpu_custom_call.1} parent=11 // pred_check_branch
          %180 = sbr.rel (%p178) target = $region28
        $region27: #{tpu_custom_call.1} parent=11 // pred_region
          _
        $region28: #{tpu_custom_call.1} parent=11 // pred_fallthru
          _
      $region12: #{tpu_custom_call.1} parent=5 // pred_fallthru
        _
      %p181 = scmp.lt.s32.totalorder %s18, 3
      // Predicated region
      $region29: #{tpu_custom_call.1} parent=5 // pred_check
        %p182 = pneg %p181
      $region30: #{tpu_custom_call.1} parent=5 // pred_check_branch
        %184 = sbr.rel (%p182) target = $region32
      $region31: #{tpu_custom_call.1} parent=5 // pred_region
        // Predicated region
        $region33: #{tpu_custom_call.1} parent=31 // pred_check
          %p185 = pneg %p38
        $region34: #{tpu_custom_call.1} parent=31 // pred_check_branch
          %187 = sbr.rel (%p185) target = $region36
        $region35: #{tpu_custom_call.1} parent=31 // pred_region
          %s188 = sand.u32 %s28, 1
          %s189 = scalar_lea.sflag [#allocation4], %s188
          %s190 = sand.u32 %s28, 1
          %s191 = smul.addr %s190, 128
          %s192 = scalar_lea.vmem [#allocation3], %s191
          %s193 = smul.u32 16, %s18
          %s195 = ssub.s32 2048, 2048
          %196 = vsyncadd %s189, %s195
          %s197 = smul.addr %s193, 128
          %s198 = scalar_lea.hbm %s0, %s197
          %s199 = sshll.u32 %s192, 4
          %s200 = int_to_ptr.vmem [resolvable:$true] %s199
          %205 = dma.hbm_to_vmem [thread:$0]  %s198, 2048, %s200, %s189, 128, 128, 8
        $region36: #{tpu_custom_call.1} parent=31 // pred_fallthru
          _
      $region32: #{tpu_custom_call.1} parent=5 // pred_fallthru
        _
      %p206 = scmp.le.s32.totalorder 1, %s18
      %p207 = scmp.lt.s32.totalorder %s18, 4
      %p208 = pnand %p206, %p207
      %p209 = pneg %p208
      // Predicated region
      $region37: #{tpu_custom_call.1} parent=5 // pred_check
        _
      $region38: #{tpu_custom_call.1} parent=5 // pred_check_branch
        %211 = sbr.rel (%p208) target = $region40
      $region39: #{tpu_custom_call.1} parent=5 // pred_region
        %s212 = ssub.s32 %s18, 1
        %s213 = sand.u32 %s31, 1
        %s214 = scalar_lea.sflag [#allocation4], %s213
        %s215 = sand.u32 %s31, 1
        %s216 = smul.addr %s215, 128
        %s217 = scalar_lea.vmem [#allocation3], %s216
        // Predicated region
        $region41: #{tpu_custom_call.1} parent=39 // pred_check
          %p218 = pneg %p44
        $region42: #{tpu_custom_call.1} parent=39 // pred_check_branch
          %220 = sbr.rel (%p218) target = $region44
        $region43: #{tpu_custom_call.1} parent=39 // pred_region
          %221 = dma.done %s214, 2048
        $region44: #{tpu_custom_call.1} parent=39 // pred_fallthru
          _
        %s222 = sand.u32 %s31, 1
        %s223 = scalar_lea.sflag [#allocation4], %s222
        %s224 = sand.u32 %s31, 1
        %s225 = smul.addr %s224, 128
        %s226 = scalar_lea.vmem [#allocation3], %s225
        %p227 = pneg %p44
        %p228 = pneg %p41
        %p229 = pneg %p65
        %p230 = pneg %p62
        %p231 = pneg %p86
        %p232 = pneg %p83
        %p233 = pneg %p107
        %p234 = pneg %p104
        %p235 = pneg %p128
        %p236 = pneg %p125
        %p237 = pneg %p154
        %p238 = pneg %p151
        %s239 = sand.u32 %s141, 1
        %s240 = scalar_lea.sflag [#allocation5], %s239
        %s241 = sand.u32 %s141, 1
        %s242 = smul.addr %s241, 8
        %s243 = scalar_lea.vmem [#allocation6], %s242
        %s244 = smul.u32 16, %s23
        %v245 = vld [vmem:[%s217] sm:$0xff]
        %v246 = vld [vmem:[%s217 + $0x8] sm:$0xff]
        %v247 = vld [vmem:[%s217 + $0x10] sm:$0xff]
        %v248 = vld [vmem:[%s217 + $0x18] sm:$0xff]
        %v249 = vld [vmem:[%s217 + $0x20] sm:$0xff]
        %v250 = vld [vmem:[%s217 + $0x28] sm:$0xff]
        %v251 = vld [vmem:[%s217 + $0x30] sm:$0xff]
        %v252 = vld [vmem:[%s217 + $0x38] sm:$0xff]
        %v253 = vld [vmem:[%s217 + $0x40] sm:$0xff]
        %v254 = vld [vmem:[%s217 + $0x48] sm:$0xff]
        %v255 = vld [vmem:[%s217 + $0x50] sm:$0xff]
        %v256 = vld [vmem:[%s217 + $0x58] sm:$0xff]
        %v257 = vld [vmem:[%s217 + $0x60] sm:$0xff]
        %v258 = vld [vmem:[%s217 + $0x68] sm:$0xff]
        %v259 = vld [vmem:[%s217 + $0x70] sm:$0xff]
        %v260 = vld [vmem:[%s217 + $0x78] sm:$0xff]
        %v261 = vld [vmem:[%s1] sm:$0xff]
        %v262 = vld [vmem:[%s1 + $0x8] sm:$0xff]
        %v263 = vld [vmem:[%s1 + $0x10] sm:$0xff]
        %v264 = vld [vmem:[%s1 + $0x18] sm:$0xff]
        %v265 = vld [vmem:[%s1 + $0x20] sm:$0xff]
        %v266 = vld [vmem:[%s1 + $0x28] sm:$0xff]
        %v267 = vld [vmem:[%s1 + $0x30] sm:$0xff]
        %v268 = vld [vmem:[%s1 + $0x38] sm:$0xff]
        %v269 = vld [vmem:[%s1 + $0x40] sm:$0xff]
        %v270 = vld [vmem:[%s1 + $0x48] sm:$0xff]
        %v271 = vld [vmem:[%s1 + $0x50] sm:$0xff]
        %v272 = vld [vmem:[%s1 + $0x58] sm:$0xff]
        %v273 = vld [vmem:[%s1 + $0x60] sm:$0xff]
        %v274 = vld [vmem:[%s1 + $0x68] sm:$0xff]
        %v275 = vld [vmem:[%s1 + $0x70] sm:$0xff]
        %v276 = vld [vmem:[%s1 + $0x78] sm:$0xff]
        %v277 = vld [vmem:[%s2] sm:$0x1]
        %v279 = vlaneseq
        %v280 = vshrl.u32 %v279, 7
        %v281 = vsub.s32 0, %v280
        %v282 = vrot.slane %v277, %v281
        %284 = vmatprep.subr.mxu0 0.0
        %285 = vmatpush1.msra.mxu0 %v276
        %286 = vmatprep.subr.mxu0 0.0
        %287 = vmatpush1.msra.mxu0 %v275
        %288 = vmatprep.subr.mxu0 0.0
        %289 = vmatpush1.msra.mxu0 %v274
        %290 = vmatprep.subr.mxu0 0.0
        %291 = vmatpush1.msra.mxu0 %v273
        %292 = vmatprep.subr.mxu0 0.0
        %293 = vmatpush1.msra.mxu0 %v272
        %294 = vmatprep.subr.mxu0 0.0
        %295 = vmatpush1.msra.mxu0 %v271
        %296 = vmatprep.subr.mxu0 0.0
        %297 = vmatpush1.msra.mxu0 %v270
        %298 = vmatprep.subr.mxu0 0.0
        %299 = vmatpush1.msra.mxu0 %v269
        %300 = vmatprep.subr.mxu0 0.0
        %301 = vmatpush1.msra.mxu0 %v268
        %302 = vmatprep.subr.mxu0 0.0
        %303 = vmatpush1.msra.mxu0 %v267
        %304 = vmatprep.subr.mxu0 0.0
        %305 = vmatpush1.msra.mxu0 %v266
        %306 = vmatprep.subr.mxu0 0.0
        %307 = vmatpush1.msra.mxu0 %v265
        %308 = vmatprep.subr.mxu0 0.0
        %309 = vmatpush1.msra.mxu0 %v264
        %310 = vmatprep.subr.mxu0 0.0
        %311 = vmatpush1.msra.mxu0 %v263
        %312 = vmatprep.subr.mxu0 0.0
        %313 = vmatpush1.msra.mxu0 %v262
        %314 = vmatprep.subr.mxu0 0.0
        %315 = vmatpush1.msra.mxu0 %v261
        %316 = vmatprep.subr.mxu0 0.0
        %317 = vmatpush2.msra.mxu0 0.0
        %318 = vmatprep.subr.mxu0 0.0
        %319 = vmatpush2.msra.mxu0 0.0
        %320 = vmatprep.subr.mxu0 0.0
        %321 = vmatpush2.msra.mxu0 0.0
        %322 = vmatprep.subr.mxu0 0.0
        %323 = vmatpush2.msra.mxu0 0.0
        %324 = vmatprep.subr.mxu0 0.0
        %325 = vmatpush2.msra.mxu0 0.0
        %326 = vmatprep.subr.mxu0 0.0
        %327 = vmatpush2.msra.mxu0 0.0
        %328 = vmatprep.subr.mxu0 0.0
        %329 = vmatpush2.msra.mxu0 0.0
        %330 = vmatprep.subr.mxu0 0.0
        %331 = vmatpush2.msra.mxu0 0.0
        %332 = vmatprep.subr.mxu0 0.0
        %333 = vmatpush2.msra.mxu0 0.0
        %334 = vmatprep.subr.mxu0 0.0
        %335 = vmatpush2.msra.mxu0 0.0
        %336 = vmatprep.subr.mxu0 0.0
        %337 = vmatpush2.msra.mxu0 0.0
        %338 = vmatprep.subr.mxu0 0.0
        %339 = vmatpush2.msra.mxu0 0.0
        %340 = vmatprep.subr.mxu0 0.0
        %341 = vmatpush2.msra.mxu0 0.0
        %342 = vmatprep.subr.mxu0 0.0
        %343 = vmatpush2.msra.mxu0 0.0
        %344 = vmatprep.subr.mxu0 0.0
        %345 = vmatpush2.msra.mxu0 0.0
        %346 = vmatprep.subr.mxu0 0.0
        %347 = vmatpush2.msra.mxu0 0.0
        %348 = vmatprep.mubr.f32.mxu0 0.0
        %349 = vmatmul.mubr.f32.gmra.mxu0 %v245
        %v350 = vpop.f32.mrf.mxu0
        %v351 = vadd.f32 %v282, %v350
        %v352 = vpop.f32.mrf.mxu0
        %353 = vmatprep.mubr.f32.mxu0 0.0
        %354 = vmatmul.mubr.f32.gmra.mxu0 %v246
        %v355 = vpop.f32.mrf.mxu0
        %v356 = vadd.f32 %v282, %v355
        %v357 = vpop.f32.mrf.mxu0
        %358 = vmatprep.mubr.f32.mxu0 0.0
        %359 = vmatmul.mubr.f32.gmra.mxu0 %v247
        %v360 = vpop.f32.mrf.mxu0
        %v361 = vadd.f32 %v282, %v360
        %v362 = vpop.f32.mrf.mxu0
        %363 = vmatprep.mubr.f32.mxu0 0.0
        %364 = vmatmul.mubr.f32.gmra.mxu0 %v248
        %v365 = vpop.f32.mrf.mxu0
        %v366 = vadd.f32 %v282, %v365
        %v367 = vpop.f32.mrf.mxu0
        %368 = vmatprep.mubr.f32.mxu0 0.0
        %369 = vmatmul.mubr.f32.gmra.mxu0 %v249
        %v370 = vpop.f32.mrf.mxu0
        %v371 = vadd.f32 %v282, %v370
        %v372 = vpop.f32.mrf.mxu0
        %373 = vmatprep.mubr.f32.mxu0 0.0
        %374 = vmatmul.mubr.f32.gmra.mxu0 %v250
        %v375 = vpop.f32.mrf.mxu0
        %v376 = vadd.f32 %v282, %v375
        %v377 = vpop.f32.mrf.mxu0
        %378 = vmatprep.mubr.f32.mxu0 0.0
        %379 = vmatmul.mubr.f32.gmra.mxu0 %v251
        %v380 = vpop.f32.mrf.mxu0
        %v381 = vadd.f32 %v282, %v380
        %v382 = vpop.f32.mrf.mxu0
        %383 = vmatprep.mubr.f32.mxu0 0.0
        %384 = vmatmul.mubr.f32.gmra.mxu0 %v252
        %v385 = vpop.f32.mrf.mxu0
        %v386 = vadd.f32 %v282, %v385
        %v387 = vpop.f32.mrf.mxu0
        %388 = vmatprep.mubr.f32.mxu0 0.0
        %389 = vmatmul.mubr.f32.gmra.mxu0 %v253
        %v390 = vpop.f32.mrf.mxu0
        %v391 = vadd.f32 %v282, %v390
        %v392 = vpop.f32.mrf.mxu0
        %393 = vmatprep.mubr.f32.mxu0 0.0
        %394 = vmatmul.mubr.f32.gmra.mxu0 %v254
        %v395 = vpop.f32.mrf.mxu0
        %v396 = vadd.f32 %v282, %v395
        %v397 = vpop.f32.mrf.mxu0
        %398 = vmatprep.mubr.f32.mxu0 0.0
        %399 = vmatmul.mubr.f32.gmra.mxu0 %v255
        %v400 = vpop.f32.mrf.mxu0
        %v401 = vadd.f32 %v282, %v400
        %v402 = vpop.f32.mrf.mxu0
        %403 = vmatprep.mubr.f32.mxu0 0.0
        %404 = vmatmul.mubr.f32.gmra.mxu0 %v256
        %v405 = vpop.f32.mrf.mxu0
        %v406 = vadd.f32 %v282, %v405
        %v407 = vpop.f32.mrf.mxu0
        %408 = vmatprep.mubr.f32.mxu0 0.0
        %409 = vmatmul.mubr.f32.gmra.mxu0 %v257
        %v410 = vpop.f32.mrf.mxu0
        %v411 = vadd.f32 %v282, %v410
        %v412 = vpop.f32.mrf.mxu0
        %413 = vmatprep.mubr.f32.mxu0 0.0
        %414 = vmatmul.mubr.f32.gmra.mxu0 %v258
        %v415 = vpop.f32.mrf.mxu0
        %v416 = vadd.f32 %v282, %v415
        %v417 = vpop.f32.mrf.mxu0
        %418 = vmatprep.mubr.f32.mxu0 0.0
        %419 = vmatmul.mubr.f32.gmra.mxu0 %v259
        %v420 = vpop.f32.mrf.mxu0
        %v421 = vadd.f32 %v282, %v420
        %v422 = vpop.f32.mrf.mxu0
        %423 = vmatprep.mubr.f32.mxu0 0.0
        %424 = vmatmul.mubr.f32.gmra.mxu0 %v260
        %v425 = vpop.f32.mrf.mxu0
        %v426 = vadd.f32 %v282, %v425
        %v427 = vpop.f32.mrf.mxu0
        %428 = vdwg.mxu0
        %v429 = vmax.f32 %v351, 0.0
        %v430 = vmax.f32 %v356, 0.0
        %v431 = vmax.f32 %v361, 0.0
        %v432 = vmax.f32 %v366, 0.0
        %v433 = vmax.f32 %v371, 0.0
        %v434 = vmax.f32 %v376, 0.0
        %v435 = vmax.f32 %v381, 0.0
        %v436 = vmax.f32 %v386, 0.0
        %v437 = vmax.f32 %v391, 0.0
        %v438 = vmax.f32 %v396, 0.0
        %v439 = vmax.f32 %v401, 0.0
        %v440 = vmax.f32 %v406, 0.0
        %v441 = vmax.f32 %v411, 0.0
        %v442 = vmax.f32 %v416, 0.0
        %v443 = vmax.f32 %v421, 0.0
        %v444 = vmax.f32 %v426, 0.0
        %v445 = vld [vmem:[%s3] sm:$0xff]
        %s446 = sld [smem:[#allocation2]]
        %v447 = vstv %s446
        %vm448 = vcmask 523264
        %v450 = vsel %vm448, %v445, 0
        %v453 = vsel %vm448, %v429, 0
        %v456 = vsel %vm448, %v430, 0
        %v459 = vsel %vm448, %v431, 0
        %v462 = vsel %vm448, %v432, 0
        %v465 = vsel %vm448, %v433, 0
        %v468 = vsel %vm448, %v434, 0
        %v471 = vsel %vm448, %v435, 0
        %v474 = vsel %vm448, %v436, 0
        %v477 = vsel %vm448, %v437, 0
        %v480 = vsel %vm448, %v438, 0
        %v483 = vsel %vm448, %v439, 0
        %v486 = vsel %vm448, %v440, 0
        %v489 = vsel %vm448, %v441, 0
        %v492 = vsel %vm448, %v442, 0
        %v495 = vsel %vm448, %v443, 0
        %v498 = vsel %vm448, %v444, 0
        %500 = vmatprep.subr.mxu0 0.0
        %501 = vmatpush1.xpose.msra.mxu0 %v498
        %502 = vmatprep.subr.mxu0 0.0
        %503 = vmatpush1.xpose.msra.mxu0 %v495
        %504 = vmatprep.subr.mxu0 0.0
        %505 = vmatpush1.xpose.msra.mxu0 %v492
        %506 = vmatprep.subr.mxu0 0.0
        %507 = vmatpush1.xpose.msra.mxu0 %v489
        %508 = vmatprep.subr.mxu0 0.0
        %509 = vmatpush1.xpose.msra.mxu0 %v486
        %510 = vmatprep.subr.mxu0 0.0
        %511 = vmatpush1.xpose.msra.mxu0 %v483
        %512 = vmatprep.subr.mxu0 0.0
        %513 = vmatpush1.xpose.msra.mxu0 %v480
        %514 = vmatprep.subr.mxu0 0.0
        %515 = vmatpush1.xpose.msra.mxu0 %v477
        %516 = vmatprep.subr.mxu0 0.0
        %517 = vmatpush1.xpose.msra.mxu0 %v474
        %518 = vmatprep.subr.mxu0 0.0
        %519 = vmatpush1.xpose.msra.mxu0 %v471
        %520 = vmatprep.subr.mxu0 0.0
        %521 = vmatpush1.xpose.msra.mxu0 %v468
        %522 = vmatprep.subr.mxu0 0.0
        %523 = vmatpush1.xpose.msra.mxu0 %v465
        %524 = vmatprep.subr.mxu0 0.0
        %525 = vmatpush1.xpose.msra.mxu0 %v462
        %526 = vmatprep.subr.mxu0 0.0
        %527 = vmatpush1.xpose.msra.mxu0 %v459
        %528 = vmatprep.subr.mxu0 0.0
        %529 = vmatpush1.xpose.msra.mxu0 %v456
        %530 = vmatprep.subr.mxu0 0.0
        %531 = vmatpush1.xpose.msra.mxu0 %v453
        %532 = vmatprep.subr.mxu0 0.0
        %533 = vmatpush2.xpose.msra.mxu0 0.0
        %534 = vmatprep.subr.mxu0 0.0
        %535 = vmatpush2.xpose.msra.mxu0 0.0
        %536 = vmatprep.subr.mxu0 0.0
        %537 = vmatpush2.xpose.msra.mxu0 0.0
        %538 = vmatprep.subr.mxu0 0.0
        %539 = vmatpush2.xpose.msra.mxu0 0.0
        %540 = vmatprep.subr.mxu0 0.0
        %541 = vmatpush2.xpose.msra.mxu0 0.0
        %542 = vmatprep.subr.mxu0 0.0
        %543 = vmatpush2.xpose.msra.mxu0 0.0
        %544 = vmatprep.subr.mxu0 0.0
        %545 = vmatpush2.xpose.msra.mxu0 0.0
        %546 = vmatprep.subr.mxu0 0.0
        %547 = vmatpush2.xpose.msra.mxu0 0.0
        %548 = vmatprep.subr.mxu0 0.0
        %549 = vmatpush2.xpose.msra.mxu0 0.0
        %550 = vmatprep.subr.mxu0 0.0
        %551 = vmatpush2.xpose.msra.mxu0 0.0
        %552 = vmatprep.subr.mxu0 0.0
        %553 = vmatpush2.xpose.msra.mxu0 0.0
        %554 = vmatprep.subr.mxu0 0.0
        %555 = vmatpush2.xpose.msra.mxu0 0.0
        %556 = vmatprep.subr.mxu0 0.0
        %557 = vmatpush2.xpose.msra.mxu0 0.0
        %558 = vmatprep.subr.mxu0 0.0
        %559 = vmatpush2.xpose.msra.mxu0 0.0
        %560 = vmatprep.subr.mxu0 0.0
        %561 = vmatpush2.xpose.msra.mxu0 0.0
        %562 = vmatprep.subr.mxu0 0.0
        %563 = vmatpush2.xpose.msra.mxu0 0.0
        %564 = vmatprep.mubr.f32.mxu0 0.0
        %565 = vmatmul.mubr.f32.gmra.mxu0 %v450
        %v566 = vpop.f32.mrf.mxu0
        %v567 = vadd.f32 %v447, %v566
        %v568 = vpop.f32.mrf.mxu0
        %569 = vdwg.mxu0
        %570 = vst [vmem:[%s243] sm:$0xff] %v567
        %s571 = sand.u32 %s141, 1
        %s572 = scalar_lea.sflag [#allocation5], %s571
        %s573 = sand.u32 %s141, 1
        %s574 = smul.addr %s573, 8
        %s575 = scalar_lea.vmem [#allocation6], %s574
        // Predicated region
        $region45: #{tpu_custom_call.1} parent=39 // pred_check
          %p576 = pneg %p151
        $region46: #{tpu_custom_call.1} parent=39 // pred_check_branch
          %578 = sbr.rel (%p576) target = $region48
        $region47: #{tpu_custom_call.1} parent=39 // pred_region
          %s580 = ssub.s32 128, 128
          %581 = vsyncadd %s572, %s580
          %s582 = smul.addr %s23, 128
          %s583 = scalar_lea.hbm %s5, %s582
          %s585 = sshll.u32 %s575, 4
          %s586 = int_to_ptr.vmem [resolvable:$true] %s585
          %588 = dma.vmem_to_hbm [thread:$0]  %s586, 128, %s583, %s572
        $region48: #{tpu_custom_call.1} parent=39 // pred_fallthru
          _
      $region40: #{tpu_custom_call.1} parent=5 // pred_fallthru
        _
      %p589 = scmp.le.s32.totalorder 2, %s18
      // Predicated region
      $region49: #{tpu_custom_call.1} parent=5 // pred_check
        %p590 = pneg %p589
      $region50: #{tpu_custom_call.1} parent=5 // pred_check_branch
        %592 = sbr.rel (%p590) target = $region52
      $region51: #{tpu_custom_call.1} parent=5 // pred_region
        %s593 = ssub.s32 %s18, 2
        // Predicated region
        $region53: #{tpu_custom_call.1} parent=51 // pred_check
          %p594 = pneg %p157
        $region54: #{tpu_custom_call.1} parent=51 // pred_check_branch
          %596 = sbr.rel (%p594) target = $region56
        $region55: #{tpu_custom_call.1} parent=51 // pred_region
          %s597 = sand.u32 %s142, 1
          %s598 = scalar_lea.sflag [#allocation5], %s597
          %s599 = sand.u32 %s142, 1
          %s600 = smul.addr %s599, 8
          %s601 = scalar_lea.vmem [#allocation6], %s600
          %602 = dma.done %s598, 128
        $region56: #{tpu_custom_call.1} parent=51 // pred_fallthru
          _
      $region52: #{tpu_custom_call.1} parent=5 // pred_fallthru
        _
    $region6: #{tpu_custom_call.1} parent=1 // loop_footer
      %s22 = sadd.s32 1, %s18
    $region7: #{tpu_custom_call.1} parent=1 // loop_footer_branch
      %17 = sbr.rel target = $region3
    $region8: #{tpu_custom_call.1} parent=1 // loop_exit
      _
    %603 = vsyncpa [#allocation4], 1
    %s604 = scalar_lea.sflag [#allocation4], 1
    %605 = vsyncpa %s604, 1
    %606 = vsyncpa [#allocation5], 1
    %s607 = scalar_lea.sflag [#allocation5], 1
    %608 = vsyncpa %s607, 1

</llo_original>
